<compile_context>
chip_gen: v7x
topology: tpu7x:2x2x1
jax: 0.10.0
libtpu: 0.0.40
codegen_flags: <defaults>
</compile_context>

<pallas_src>
import math

import jax
import jax.numpy as jnp
from jax.experimental import pallas as pl
from jax.experimental.pallas import tpu as pltpu


# ---------------------------------------------------------------------------
# torch.split size semantics
# ---------------------------------------------------------------------------
def _split_sizes(total, size_or_sizes):
    """Mirror torch.split size semantics."""
    if isinstance(size_or_sizes, int):
        sizes, left = [], total
        while left > 0:
            s = min(size_or_sizes, left)
            sizes.append(s)
            left -= s
        return tuple(sizes)
    sizes = tuple(int(s) for s in size_or_sizes)
    assert sum(sizes) == total, "split sizes must sum to dim extent"
    return sizes


# ---------------------------------------------------------------------------
# Kernels
# ---------------------------------------------------------------------------
def _make_copy_kernel(n_out):
    """Each output's input slab is delivered by its own BlockSpec: pure ref copies."""

    def kernel(*refs):
        in_refs, out_refs = refs[:n_out], refs[n_out:]
        for i_ref, o_ref in zip(in_refs, out_refs):
            o_ref[...] = i_ref[...]

    return kernel


def _make_slice_kernel(lane_offsets, lane_widths):
    """Fallback: one full-row input block, lane-dense static slices per output."""

    def kernel(x_ref, *out_refs):
        for o_ref, start, width in zip(out_refs, lane_offsets, lane_widths):
            o_ref[...] = x_ref[:, start:start + width]

    return kernel


def _in_index_map(lane_block):
    return lambda r: (r, lane_block)


def _out_index_map(r):
    return (r, 0)


# ---------------------------------------------------------------------------
# Pallas wrapper
# ---------------------------------------------------------------------------
_VMEM_BUDGET_BYTES = 8 * 1024 * 1024  # conservative: well under v7x scoped VMEM


def split_tensor_pallas(x, size_or_sizes, dim):
    """Pallas equivalent of SplitTensor(size_or_sizes, dim)(x)."""
    dim = dim % x.ndim
    sizes = _split_sizes(x.shape[dim], size_or_sizes)

    outer = math.prod(x.shape[:dim]) if dim > 0 else 1
    inner = math.prod(x.shape[dim + 1:]) if dim + 1 < x.ndim else 1
    total_w = x.shape[dim] * inner

    # Lane-dense collapse: split dim + trailing dims become the lane axis.
    x2d = x.reshape(outer, total_w)

    lane_ws = [s * inner for s in sizes]
    lane_offs, off = [], 0
    for w in lane_ws:
        lane_offs.append(off)
        off += w

    # Row-tile sizing against a VMEM budget (input + output blocks, double-buffered).
    itemsize = jnp.dtype(x.dtype).itemsize
    bytes_per_row = total_w * itemsize
    max_rows = max(1, _VMEM_BUDGET_BYTES // (4 * bytes_per_row))
    if max_rows >= outer:
        row_tile = outer  # full extent -> always satisfies the (8,128) rule
    else:
        row_tile = min(outer, max(8, (max_rows // 8) * 8))
    grid = (pl.cdiv(outer, row_tile),)

    out_shapes_2d = tuple(jax.ShapeDtypeStruct((outer, w), x.dtype) for w in lane_ws)
    out_specs = tuple(pl.BlockSpec((row_tile, w), _out_index_map) for w in lane_ws)

    # Prefer BlockSpec-driven slicing (each byte DMA'd once; kernel = pure copies).
    aligned = all(w % 128 == 0 and o % w == 0 for o, w in zip(lane_offs, lane_ws))
    if aligned:
        in_specs = [
            pl.BlockSpec((row_tile, w), _in_index_map(o // w))
            for o, w in zip(lane_offs, lane_ws)
        ]
        kernel = _make_copy_kernel(len(sizes))
        args = (x2d,) * len(sizes)
    else:
        in_specs = [pl.BlockSpec((row_tile, total_w), _out_index_map)]
        kernel = _make_slice_kernel(lane_offs, lane_ws)
        args = (x2d,)

    outs_2d = pl.pallas_call(
        kernel,
        out_shape=out_shapes_2d,
        grid=grid,
        in_specs=in_specs,
        out_specs=out_specs,
        compiler_params=pltpu.CompilerParams(
            dimension_semantics=("parallel",),  # shard rows across TCs (v7x)
        ),
    )(*args)

    nd_shapes = [
        tuple(s if d == dim else x.shape[d] for d in range(x.ndim)) for s in sizes
    ]
    return tuple(o.reshape(sh) for o, sh in zip(outs_2d, nd_shapes))


def split_tensor(x, size_or_sizes, dim, *, min_pallas_bytes=1 << 20):
    """SplitTensor forward.  Tiny inputs use plain XLA slices (kernel launch
    overhead dominates a sub-microsecond copy); larger inputs use the Pallas
    kernel above."""
    d = dim % x.ndim
    if x.size * jnp.dtype(x.dtype).itemsize < min_pallas_bytes:
        sizes = _split_sizes(x.shape[d], size_or_sizes)
        outs, off = [], 0
        for s in sizes:
            outs.append(jax.lax.slice_in_dim(x, off, off + s, axis=d))
            off += s
        return tuple(outs)
    return split_tensor_pallas(x, size_or_sizes, dim)


# ---------------------------------------------------------------------------
# Self-test
# ---------------------------------------------------------------------------
def _reference_split(x, size_or_sizes, dim):
    d = dim % x.ndim
    sizes = _split_sizes(x.shape[d], size_or_sizes)
    outs, off = [], 0
    for s in sizes:
        outs.append(jax.lax.slice_in_dim(x, off, off + s, axis=d))
        off += s
    return tuple(outs)


if __name__ == "__main__":
    key = jax.random.PRNGKey(0)
    # Module usage: split a [2, 4, 16, 16] NCHW tensor along channels.
    x = jax.random.normal(key, (2, 4, 16, 16), dtype=jnp.float32)

    ok = True

    # Equal-size split (chunks of 2 channels) -> BlockSpec-slicing copy path.
    outs = jax.block_until_ready(split_tensor_pallas(x, 2, 1))
    for o, r in zip(outs, _reference_split(x, 2, 1)):
        ok = ok and o.shape == r.shape and bool(jnp.array_equal(o, r))

    # Unequal-size split -> lane-dense in-kernel slice fallback path.
    outs_u = jax.block_until_ready(split_tensor_pallas(x, [1, 3], 1))
    for o, r in zip(outs_u, _reference_split(x, [1, 3], 1)):
        ok = ok and o.shape == r.shape and bool(jnp.array_equal(o, r))

    # Dispatcher (tiny input takes the lax fast path) matches too.
    outs_d = jax.block_until_ready(split_tensor(x, 2, 1))
    for o, r in zip(outs_d, _reference_split(x, 2, 1)):
        ok = ok and bool(jnp.array_equal(o, r))

    assert ok, "Pallas split does not match reference"
    print("KERNEL_OK")
</pallas_src>

<mosaic_0001>
module attributes {stable_mosaic.version = 11 : i64} {
  func.func @kernel(%arg0: i32, %arg1: memref<2x512xf32, #tpu.memory_space<vmem>>, %arg2: memref<2x512xf32, #tpu.memory_space<vmem>>, %arg3: memref<2x512xf32, #tpu.memory_space<vmem>>, %arg4: memref<2x512xf32, #tpu.memory_space<vmem>>) attributes {dimension_semantics = [#tpu.dimension_semantics<parallel>], iteration_bounds = array<i64: 1>, scalar_prefetch = 0 : i64, scratch_operands = 0 : i64, tpu.core_type = #tpu.core_type<tc>, window_params = [{transform_indices = @transform_0, window_bounds = array<i64: 2, 512>}, {transform_indices = @transform_1, window_bounds = array<i64: 2, 512>}, {transform_indices = @transform_2, window_bounds = array<i64: 2, 512>}, {transform_indices = @transform_3, window_bounds = array<i64: 2, 512>}]} {
    %c0 = arith.constant 0 : index
    %c0_0 = arith.constant 0 : index
    %0 = vector.load %arg1[%c0, %c0_0] : memref<2x512xf32, #tpu.memory_space<vmem>>, vector<2x512xf32>
    %c0_1 = arith.constant 0 : index
    %c0_2 = arith.constant 0 : index
    %1 = vector.load %arg3[%c0_1, %c0_2] : memref<2x512xf32, #tpu.memory_space<vmem>>, vector<2x512xf32>
    tpu.vector_store %arg3[%c0_1, %c0_2], %0 {strides = array<i32>} : memref<2x512xf32, #tpu.memory_space<vmem>>, vector<2x512xf32>,
    %c0_3 = arith.constant 0 : index
    %c0_4 = arith.constant 0 : index
    %2 = vector.load %arg2[%c0_3, %c0_4] : memref<2x512xf32, #tpu.memory_space<vmem>>, vector<2x512xf32>
    %c0_5 = arith.constant 0 : index
    %c0_6 = arith.constant 0 : index
    %3 = vector.load %arg4[%c0_5, %c0_6] : memref<2x512xf32, #tpu.memory_space<vmem>>, vector<2x512xf32>
    tpu.vector_store %arg4[%c0_5, %c0_6], %2 {strides = array<i32>} : memref<2x512xf32, #tpu.memory_space<vmem>>, vector<2x512xf32>,
    return
  }
  func.func @transform_0(%arg0: i32) -> (i32, i32) {
    %c0_i32 = arith.constant 0 : i32
    %c0_i32_0 = arith.constant 0 : i32
    return %arg0, %c0_i32 : i32, i32
  }
  func.func @transform_1(%arg0: i32) -> (i32, i32) {
    %c1_i32 = arith.constant 1 : i32
    %c0_i32 = arith.constant 0 : i32
    return %arg0, %c1_i32 : i32, i32
  }
  func.func @transform_2(%arg0: i32) -> (i32, i32) {
    %c0_i32 = arith.constant 0 : i32
    %c0_i32_0 = arith.constant 0 : i32
    return %arg0, %c0_i32 : i32, i32
  }
  func.func @transform_3(%arg0: i32) -> (i32, i32) {
    %c0_i32 = arith.constant 0 : i32
    %c0_i32_0 = arith.constant 0 : i32
    return %arg0, %c0_i32 : i32, i32
  }
}

</mosaic_0001>

<llo_original>
// kernel: tpu_custom_call.1
$region0: #{tpu_custom_call.1}
  #allocation0 [shape = 'u32[]', space=smem, size = 0x4, offset = 0x4, fixed_abs, tag = 'smem constant byte address 0x4 - core index']
  #allocation1 [shape = 'u32[144,128]{1,0:T(1,128)}', space=vmem, size = 0x12000, scoped, tag = 'internal scratch']
  %s0 = inlined_call_operand.hbm [shape: f32[2,1024], index: 0, kind: input, shape index: {}]
  %s1 = inlined_call_operand.hbm [shape: f32[2,1024], index: 1, kind: input, shape index: {}]
  %s2 = inlined_call_operand.hbm [shape: f32[2,512], index: 2, kind: output, shape index: {0}]
  %s3 = inlined_call_operand.hbm [shape: f32[2,512], index: 3, kind: output, shape index: {1}]
  %4 = xla_tuple %s2, %s3
  %s5 = sld [smem:[#allocation0]]
  $region34: #{tpu_custom_call.1} parent=0
    _
  %s7 = ssub.s32 1, %s5
  %s8 = scalar_select 0, %s7, %s5
  $region1: #{tpu_custom_call.1} parent=0
    #allocation2 [shape = 'u8[4096]{0}', space=vmem, size = 0x1000, scoped, tag = 'input window, operand 0, single buffered']
    #allocation3 [shape = 's32[1]{0}', space=sflag, size = 0x4, scoped, tag = 'scoped memory for tpu_custom_call.1']
    #allocation4 [shape = 's32[1]{0}', space=sflag, size = 0x4, scoped, tag = 'scoped memory for tpu_custom_call.1']
    #allocation5 [shape = 'u8[4096]{0}', space=vmem, size = 0x1000, scoped, tag = 'input window, operand 1, single buffered']
    #allocation6 [shape = 's32[1]{0}', space=sflag, size = 0x4, scoped, tag = 'scoped memory for tpu_custom_call.1']
    #allocation7 [shape = 'u8[4096]{0}', space=vmem, size = 0x1000, scoped, tag = 'output window, operand 0, single buffered']
    #allocation8 [shape = 'u8[4096]{0}', space=vmem, size = 0x1000, scoped, tag = 'output window, operand 1, single buffered']
    #allocation9 [shape = 's32[1]{0}', space=sflag, size = 0x4, scoped, tag = 'scoped memory for tpu_custom_call.1']
    %9 = vsyncpa [#allocation3], 0
    %10 = vsyncpa [#allocation6], 0
    %11 = vsyncpa [#allocation4], 0
    %12 = vsyncpa [#allocation9], 0
    // Predicated region
    $region2: #{tpu_custom_call.1} parent=1 // pred_check
      _
    $region3: #{tpu_custom_call.1} parent=1 // pred_check_branch
      %14 = sbr.rel (0) target = $region5
    $region4: #{tpu_custom_call.1} parent=1 // pred_region
      %s16 = ssub.s32 128, 128
      %17 = vsyncadd [#allocation3], %s16
      %s19 = sshll.u32 [#allocation2], 4
      %s20 = int_to_ptr.vmem [resolvable:$true] %s19
      %22 = dma.hbm_to_vmem [thread:$0]  %s0, 128, %s20, [#allocation3]
    $region5: #{tpu_custom_call.1} parent=1 // pred_fallthru
      _
    // Predicated region
    $region6: #{tpu_custom_call.1} parent=1 // pred_check
      _
    $region7: #{tpu_custom_call.1} parent=1 // pred_check_branch
      %24 = sbr.rel (0) target = $region9
    $region8: #{tpu_custom_call.1} parent=1 // pred_region
      %s26 = ssub.s32 128, 128
      %27 = vsyncadd [#allocation6], %s26
      %s28 = scalar_lea.hbm %s1, 128
      %s30 = sshll.u32 [#allocation5], 4
      %s31 = int_to_ptr.vmem [resolvable:$true] %s30
      %33 = dma.hbm_to_vmem [thread:$0]  %s28, 128, %s31, [#allocation6]
    $region9: #{tpu_custom_call.1} parent=1 // pred_fallthru
      _
    // Predicated region
    $region10: #{tpu_custom_call.1} parent=1 // pred_check
      _
    $region11: #{tpu_custom_call.1} parent=1 // pred_check_branch
      %35 = sbr.rel (0) target = $region13
    $region12: #{tpu_custom_call.1} parent=1 // pred_region
      %36 = dma.done [#allocation3], 128
    $region13: #{tpu_custom_call.1} parent=1 // pred_fallthru
      _
    // Predicated region
    $region14: #{tpu_custom_call.1} parent=1 // pred_check
      _
    $region15: #{tpu_custom_call.1} parent=1 // pred_check_branch
      %38 = sbr.rel (0) target = $region17
    $region16: #{tpu_custom_call.1} parent=1 // pred_region
      %39 = dma.done [#allocation6], 128
    $region17: #{tpu_custom_call.1} parent=1 // pred_fallthru
      _
    %v40 = vld [vmem:[#allocation2] sm:$0xff]
    %41 = vst [vmem:[#allocation7] sm:$0xff] %v40
    %v42 = vld [vmem:[#allocation5] sm:$0xff]
    %43 = vst [vmem:[#allocation8] sm:$0xff] %v42
    // Predicated region
    $region18: #{tpu_custom_call.1} parent=1 // pred_check
      _
    $region19: #{tpu_custom_call.1} parent=1 // pred_check_branch
      %45 = sbr.rel (0) target = $region21
    $region20: #{tpu_custom_call.1} parent=1 // pred_region
      %s47 = ssub.s32 128, 128
      %48 = vsyncadd [#allocation4], %s47
      %s50 = sshll.u32 [#allocation7], 4
      %s51 = int_to_ptr.vmem [resolvable:$true] %s50
      %53 = dma.vmem_to_hbm [thread:$0]  %s51, 128, %s2, [#allocation4]
    $region21: #{tpu_custom_call.1} parent=1 // pred_fallthru
      _
    // Predicated region
    $region22: #{tpu_custom_call.1} parent=1 // pred_check
      _
    $region23: #{tpu_custom_call.1} parent=1 // pred_check_branch
      %55 = sbr.rel (0) target = $region25
    $region24: #{tpu_custom_call.1} parent=1 // pred_region
      %s57 = ssub.s32 128, 128
      %58 = vsyncadd [#allocation9], %s57
      %s60 = sshll.u32 [#allocation8], 4
      %s61 = int_to_ptr.vmem [resolvable:$true] %s60
      %63 = dma.vmem_to_hbm [thread:$0]  %s61, 128, %s3, [#allocation9]
    $region25: #{tpu_custom_call.1} parent=1 // pred_fallthru
      _
    // Predicated region
    $region26: #{tpu_custom_call.1} parent=1 // pred_check
      _
    $region27: #{tpu_custom_call.1} parent=1 // pred_check_branch
      %65 = sbr.rel (0) target = $region29
    $region28: #{tpu_custom_call.1} parent=1 // pred_region
      %66 = dma.done [#allocation4], 128
    $region29: #{tpu_custom_call.1} parent=1 // pred_fallthru
      _
    // Predicated region
    $region30: #{tpu_custom_call.1} parent=1 // pred_check
      _
    $region31: #{tpu_custom_call.1} parent=1 // pred_check_branch
      %68 = sbr.rel (0) target = $region33
    $region32: #{tpu_custom_call.1} parent=1 // pred_region
      %69 = dma.done [#allocation9], 128
    $region33: #{tpu_custom_call.1} parent=1 // pred_fallthru
      _
    %70 = vsyncpa [#allocation3], 1
    %71 = vsyncpa [#allocation6], 1
    %72 = vsyncpa [#allocation4], 1
    %73 = vsyncpa [#allocation9], 1

</llo_original>
